<compile_context>
chip_gen: v7x
topology: tpu7x:2x2x1
jax: 0.10.0
libtpu: 0.0.40
codegen_flags: <defaults>
</compile_context>

<pallas_src>
import functools

import jax
import jax.numpy as jnp
from jax.experimental import pallas as pl
from jax.experimental.pallas import tpu as pltpu

_LANE = 128
_SUBLANE = 8


def make_positional_encoding_table(num_hiddens, max_len=1000, dtype=jnp.float32):
    """Builds P of shape (max_len, num_hiddens) exactly like the torch __init__."""
    pos = jnp.arange(max_len, dtype=jnp.float32).reshape(-1, 1)
    div = jnp.power(
        10000.0, jnp.arange(0, num_hiddens, 2, dtype=jnp.float32) / num_hiddens
    )
    X = pos / div  # (max_len, ceil(num_hiddens / 2))
    P = jnp.zeros((max_len, num_hiddens), dtype=jnp.float32)
    P = P.at[:, 0::2].set(jnp.sin(X))
    P = P.at[:, 1::2].set(jnp.cos(X[:, : num_hiddens // 2]))
    return P.astype(dtype)


# ---------------------------------------------------------------------------
# Kernels
# ---------------------------------------------------------------------------
def _add_pe_kernel(x_ref, p_ref, o_ref):
    # x_ref: (TB, TL); p_ref: (1, TL) broadcast over the row-tile.
    o_ref[...] = (x_ref[...] + p_ref[...]).astype(o_ref.dtype)


def _add_pe_dropout_kernel(x_ref, p_ref, bits_ref, o_ref, *, threshold, scale):
    # Inverted dropout: keep with prob (1-p), scale kept values by 1/(1-p).
    # Integer threshold compare on raw uint32 bits (no float-convert chain).
    y = x_ref[...] + p_ref[...]
    keep = bits_ref[...] >= jnp.uint32(threshold)
    o_ref[...] = jnp.where(keep, y * scale, jnp.zeros_like(y)).astype(o_ref.dtype)


# ---------------------------------------------------------------------------
# Tile-size selection
# ---------------------------------------------------------------------------
def _choose_lane_tile(L, max_lane_elems=4096):
    """Largest multiple of 128 that divides L (capped), else the full extent."""
    if L % _LANE != 0:
        return L  # must use full-dim block to satisfy the (8,128) rule
    t = min(L, max_lane_elems)
    t -= t % _LANE
    t = max(t, _LANE)
    while L % t != 0:
        t -= _LANE
    return t


def _choose_row_tile(R, lane_tile, itemsize, target_bytes=2 * 1024 * 1024):
    """Row tile that divides R, is a multiple of 8 (or the full dim), and keeps
    one VMEM buffer near target_bytes."""
    max_rows = max(1, target_bytes // max(1, lane_tile * itemsize))
    if R <= max_rows or R % _SUBLANE != 0:
        return R
    t = max(_SUBLANE, (min(R, max_rows) // _SUBLANE) * _SUBLANE)
    while R % t != 0:
        t -= _SUBLANE
    return t


# ---------------------------------------------------------------------------
# Wrapper
# ---------------------------------------------------------------------------
def positional_encoding(x, P, *, dropout_p=0.0, train=False, rng_key=None):
    """x: (B, S, H); P: (max_len, H).  Returns (B, S, H)."""
    B, S, H = x.shape
    L = S * H

    # Lane-dense view: last dim = S*H (multiple of 128 for realistic shapes).
    x2 = x.reshape(B, L)
    p2 = P[:S, :].astype(x.dtype).reshape(1, L)  # cast once, stays packed (bf16 ok)

    tl = _choose_lane_tile(L)
    tb = _choose_row_tile(B, tl, x.dtype.itemsize)
    # Lane-tile axis OUTER so the P block index is constant across the inner
    # row-tile loop and its DMA is skipped.
    grid = (L // tl, B // tb)

    x_spec = pl.BlockSpec((tb, tl), lambda j, i: (i, j))
    p_spec = pl.BlockSpec((1, tl), lambda j, i: (0, j))
    o_spec = pl.BlockSpec((tb, tl), lambda j, i: (i, j))

    use_dropout = bool(train) and float(dropout_p) > 0.0
    if use_dropout:
        if rng_key is None:
            rng_key = jax.random.PRNGKey(0)
        # TODO(synk): dropout bits come from jax.random (host/XLA side) rather
        # than the in-kernel TPU PRNG so the kernel also runs under interpret
        # mode; RNG stream differs from torch's nn.Dropout, semantics match.
        bits = jax.random.bits(rng_key, (B, L), dtype=jnp.uint32)
        threshold = min(int(round(float(dropout_p) * (2 ** 32))), 2 ** 32 - 1)
        kernel = functools.partial(
            _add_pe_dropout_kernel,
            threshold=threshold,
            scale=1.0 / (1.0 - float(dropout_p)),
        )
        in_specs = [x_spec, p_spec, pl.BlockSpec((tb, tl), lambda j, i: (i, j))]
        operands = (x2, p2, bits)
    else:
        kernel = _add_pe_kernel
        in_specs = [x_spec, p_spec]
        operands = (x2, p2)

    out = pl.pallas_call(
        kernel,
        out_shape=jax.ShapeDtypeStruct((B, L), x.dtype),
        grid=grid,
        in_specs=in_specs,
        out_specs=o_spec,
        compiler_params=pltpu.CompilerParams(
            dimension_semantics=("parallel", "parallel")
        ),
    )(*operands)
    return out.reshape(B, S, H)


if __name__ == "__main__":
    B, S, H = 2, 8, 32
    max_len = 64
    dropout_rate = 0.5

    key = jax.random.PRNGKey(0)
    kx, kd = jax.random.split(key)
    x = jax.random.normal(kx, (B, S, H), dtype=jnp.float32)

    P = make_positional_encoding_table(H, max_len=max_len)

    # Eval-mode forward (dropout is identity) -- check against pure-JAX reference.
    y_eval = positional_encoding(x, P, dropout_p=dropout_rate, train=False)
    y_eval = jax.block_until_ready(y_eval)
    ref = x + P[:S, :][None, :, :]
    assert jnp.allclose(y_eval, ref, atol=1e-5, rtol=1e-5), "eval-mode mismatch"

    # Train-mode forward (stochastic inverted dropout).
    y_train = positional_encoding(
        x, P, dropout_p=dropout_rate, train=True, rng_key=kd
    )
    y_train = jax.block_until_ready(y_train)
    scaled = ref / (1.0 - dropout_rate)
    consistent = jnp.all(
        jnp.where(
            y_train == 0.0, True, jnp.isclose(y_train, scaled, atol=1e-4, rtol=1e-4)
        )
    )
    assert bool(consistent), "train-mode dropout scaling mismatch"

    print("KERNEL_OK")
</pallas_src>

<mosaic_0001>
module attributes {stable_mosaic.version = 11 : i64} {
  func.func @_add_pe_kernel(%arg0: i32, %arg1: i32, %arg2: memref<2x256xf32, #tpu.memory_space<vmem>>, %arg3: memref<1x256xf32, #tpu.memory_space<vmem>>, %arg4: memref<2x256xf32, #tpu.memory_space<vmem>>) attributes {dimension_semantics = [#tpu.dimension_semantics<parallel>, #tpu.dimension_semantics<parallel>], iteration_bounds = array<i64: 1, 1>, scalar_prefetch = 0 : i64, scratch_operands = 0 : i64, tpu.core_type = #tpu.core_type<tc>, window_params = [{transform_indices = @transform_0, window_bounds = array<i64: 2, 256>}, {transform_indices = @transform_1, window_bounds = array<i64: 1, 256>}, {transform_indices = @transform_2, window_bounds = array<i64: 2, 256>}]} {
    %c0 = arith.constant 0 : index
    %c0_0 = arith.constant 0 : index
    %0 = vector.load %arg2[%c0, %c0_0] : memref<2x256xf32, #tpu.memory_space<vmem>>, vector<2x256xf32>
    %c0_1 = arith.constant 0 : index
    %c0_2 = arith.constant 0 : index
    %1 = vector.load %arg3[%c0_1, %c0_2] : memref<1x256xf32, #tpu.memory_space<vmem>>, vector<1x256xf32>
    %2 = vector.broadcast %1 : vector<1x256xf32> to vector<2x256xf32>
    %3 = arith.addf %0, %2 : vector<2x256xf32>
    %c0_3 = arith.constant 0 : index
    %c0_4 = arith.constant 0 : index
    %4 = vector.load %arg4[%c0_3, %c0_4] : memref<2x256xf32, #tpu.memory_space<vmem>>, vector<2x256xf32>
    tpu.vector_store %arg4[%c0_3, %c0_4], %3 {strides = array<i32>} : memref<2x256xf32, #tpu.memory_space<vmem>>, vector<2x256xf32>,
    return
  }
  func.func @transform_0(%arg0: i32, %arg1: i32) -> (i32, i32) {
    %c0_i32 = arith.constant 0 : i32
    return %arg1, %arg0 : i32, i32
  }
  func.func @transform_1(%arg0: i32, %arg1: i32) -> (i32, i32) {
    %c0_i32 = arith.constant 0 : i32
    %c0_i32_0 = arith.constant 0 : i32
    return %c0_i32, %arg0 : i32, i32
  }
  func.func @transform_2(%arg0: i32, %arg1: i32) -> (i32, i32) {
    %c0_i32 = arith.constant 0 : i32
    return %arg1, %arg0 : i32, i32
  }
}

</mosaic_0001>

<llo_original>
// kernel: tpu_custom_call.1
$region0: #{tpu_custom_call.1}
  #allocation0 [shape = 'u32[]', space=smem, size = 0x4, offset = 0x4, fixed_abs, tag = 'smem constant byte address 0x4 - core index']
  #allocation1 [shape = 'u32[144,128]{1,0:T(1,128)}', space=vmem, size = 0x12000, scoped, tag = 'internal scratch']
  %s0 = inlined_call_operand.hbm [shape: f32[2,256], index: 0, kind: input, shape index: {}]
  %s1 = inlined_call_operand.vmem [shape: f32[1,256], index: 1, kind: input, shape index: {}]
  %s2 = inlined_call_operand.hbm [shape: f32[2,256], index: 2, kind: output, shape index: {}]
  %s3 = sld [smem:[#allocation0]]
  $region22: #{tpu_custom_call.1} parent=0
    _
  %s5 = ssub.s32 1, %s3
  %s6 = scalar_select 0, %s5, %s3
  $region1: #{tpu_custom_call.1} parent=0
    #allocation2 [shape = 'u8[2048]{0}', space=vmem, size = 0x800, scoped, tag = 'input window, operand 0, single buffered']
    #allocation3 [shape = 's32[1]{0}', space=sflag, size = 0x4, scoped, tag = 'scoped memory for tpu_custom_call.1']
    #allocation4 [shape = 's32[1]{0}', space=sflag, size = 0x4, scoped, tag = 'scoped memory for tpu_custom_call.1']
    #allocation5 [shape = 'u8[2048]{0}', space=vmem, size = 0x800, scoped, tag = 'output window, operand 0, single buffered']
    %7 = vsyncpa [#allocation3], 0
    %8 = vsyncpa [#allocation4], 0
    // Predicated region
    $region2: #{tpu_custom_call.1} parent=1 // pred_check
      _
    $region3: #{tpu_custom_call.1} parent=1 // pred_check_branch
      %10 = sbr.rel (0) target = $region5
    $region4: #{tpu_custom_call.1} parent=1 // pred_region
      %s12 = ssub.s32 64, 64
      %13 = vsyncadd [#allocation3], %s12
      %s15 = sshll.u32 [#allocation2], 4
      %s16 = int_to_ptr.vmem [resolvable:$true] %s15
      %18 = dma.hbm_to_vmem [thread:$0]  %s0, 64, %s16, [#allocation3]
    $region5: #{tpu_custom_call.1} parent=1 // pred_fallthru
      _
    // Predicated region
    $region6: #{tpu_custom_call.1} parent=1 // pred_check
      _
    $region7: #{tpu_custom_call.1} parent=1 // pred_check_branch
      %20 = sbr.rel (0) target = $region9
    $region8: #{tpu_custom_call.1} parent=1 // pred_region
      _
    $region9: #{tpu_custom_call.1} parent=1 // pred_fallthru
      _
    // Predicated region
    $region10: #{tpu_custom_call.1} parent=1 // pred_check
      _
    $region11: #{tpu_custom_call.1} parent=1 // pred_check_branch
      %22 = sbr.rel (0) target = $region13
    $region12: #{tpu_custom_call.1} parent=1 // pred_region
      %23 = dma.done [#allocation3], 64
    $region13: #{tpu_custom_call.1} parent=1 // pred_fallthru
      _
    %v24 = vld [vmem:[#allocation2] sm:$0xf]
    %v25 = vld [vmem:[%s1] sm:$0x3]
    %v27 = vlaneseq
    %v28 = vshrl.u32 %v27, 7
    %v29 = vsub.s32 0, %v28
    %v30 = vrot.slane %v25, %v29
    %v31 = vlaneseq
    %v32 = vshrl.u32 %v31, 7
    %v33 = vsub.s32 1, %v32
    %v34 = vrot.slane %v25, %v33
    %v35 = vcombine.low %v30, %v34
    %v37 = vunpack.c.l.s4 1983009808
    %v38 = vunpack.c.0.s8 %v37
    %v39 = vlaneseq
    %v40 = vshrl.u32 %v39, 7
    %v41 = vsub.s32 %v38, %v40
    %v42 = vrot.slane %v35, %v41
    %v44 = vadd.f32 %v24, %v42
    %45 = vst [vmem:[#allocation5] sm:$0xf] %v44
    // Predicated region
    $region14: #{tpu_custom_call.1} parent=1 // pred_check
      _
    $region15: #{tpu_custom_call.1} parent=1 // pred_check_branch
      %47 = sbr.rel (0) target = $region17
    $region16: #{tpu_custom_call.1} parent=1 // pred_region
      %s49 = ssub.s32 64, 64
      %50 = vsyncadd [#allocation4], %s49
      %s52 = sshll.u32 [#allocation5], 4
      %s53 = int_to_ptr.vmem [resolvable:$true] %s52
      %55 = dma.vmem_to_hbm [thread:$0]  %s53, 64, %s2, [#allocation4]
    $region17: #{tpu_custom_call.1} parent=1 // pred_fallthru
      _
    // Predicated region
    $region18: #{tpu_custom_call.1} parent=1 // pred_check
      _
    $region19: #{tpu_custom_call.1} parent=1 // pred_check_branch
      %57 = sbr.rel (0) target = $region21
    $region20: #{tpu_custom_call.1} parent=1 // pred_region
      %58 = dma.done [#allocation4], 64
    $region21: #{tpu_custom_call.1} parent=1 // pred_fallthru
      _
    %59 = vsyncpa [#allocation3], 1
    %60 = vsyncpa [#allocation4], 1

</llo_original>
